<compile_context>
chip_gen: v7x
topology: tpu7x:2x2x1
jax: 0.10.0
libtpu: 0.0.40
codegen_flags: <defaults>
</compile_context>

<pallas_src>
import functools

import jax
import jax.numpy as jnp
from jax.experimental import pallas as pl
from jax.experimental.pallas import tpu as pltpu


# ----------------------------------------------------------------------------
# Fused kernel: conv3x3 (banded matmuls) + BN (train batch stats) + ReLU
# ----------------------------------------------------------------------------
def _conv_bn_relu_kernel(xp_ref, wt_ref, p_ref, gam_ref, bet_ref, o_ref, *, width):
    # xp : (N, H+2, W*Cin)   bf16  vertically zero-padded, lane-folded input
    # wt : (3, W*Cin, W*Cout) bf16 banded tap weights (one per dy)
    # p  : (W*Cout, W*Cout)  f32   0/1 group-sum-and-tile matrix
    # gam/bet : (1, W*Cout)  f32   gamma / beta tiled over the W lane groups
    # o  : (N, H, W*Cout)    bf16  ReLU(BN(conv(x)))
    n_img, h_pad, _ = xp_ref.shape
    h = h_pad - 2
    wcout = o_ref.shape[2]
    inv_cnt = 1.0 / float(n_img * h * width)

    # --- conv: 3 banded matmuls per image, f32 accumulation, stays in VMEM ---
    accs = []
    s = jnp.zeros((1, wcout), jnp.float32)
    for n in range(n_img):                       # N is small & static -> unrolled
        acc = jnp.zeros((h, wcout), jnp.float32)
        for dy in range(3):
            acc = acc + jnp.dot(xp_ref[n, pl.ds(dy, h), :], wt_ref[dy],
                                preferred_element_type=jnp.float32)
        accs.append(acc)
        s = s + jnp.sum(acc, axis=0, keepdims=True)

    # --- BN batch statistics (train mode), per channel, tiled over W groups ---
    mean_t = jnp.dot(s, p_ref[...], preferred_element_type=jnp.float32) * inv_cnt
    ss = jnp.zeros((1, wcout), jnp.float32)
    for n in range(n_img):
        d = accs[n] - mean_t                     # centered second pass (stable var)
        ss = ss + jnp.sum(d * d, axis=0, keepdims=True)
    var_t = jnp.dot(ss, p_ref[...], preferred_element_type=jnp.float32) * inv_cnt
    scale_t = gam_ref[...] * jax.lax.rsqrt(var_t + 1e-5)
    shift_t = bet_ref[...] - mean_t * scale_t

    # --- affine + ReLU epilogue, lane-dense bf16 store ---
    for n in range(n_img):
        o_ref[n] = jnp.maximum(accs[n] * scale_t + shift_t, 0.0).astype(o_ref.dtype)


def conv3x3_bn_relu(x, w, gamma, beta):
    """Fused Conv3x3(pad=1, bias-free) + BatchNorm(train batch stats) + ReLU.

    x: (N, H, W, Cin) (bf16 or f32), w: (3, 3, Cin, Cout) f32.
    Returns bf16 (N, H, W, Cout).
    """
    N, H, W, Cin = x.shape
    Cout = w.shape[-1]
    WCin, WCout = W * Cin, W * Cout

    # Lane-fold (W, C) -> W*C and zero-pad H by one row each side.  Horizontal
    # padding is folded into the banded weights, so no W padding is needed.
    xp = jnp.pad(x.reshape(N, H, WCin), ((0, 0), (1, 1), (0, 0))).astype(jnp.bfloat16)

    # Banded ("Toeplitz in W") weights:
    #   wt[dy][(c+dx-1)*Cin + ci, c*Cout + co] = w[dy, dx, ci, co]   (0 <= c+dx-1 < W)
    eyes = [jnp.eye(W, k=1 - dx, dtype=w.dtype) for dx in range(3)]
    wt = jnp.stack([sum(jnp.kron(eyes[dx], w[dy, dx]) for dx in range(3))
                    for dy in range(3)]).astype(jnp.bfloat16)

    # 0/1 group-sum-and-tile matrix: (s @ p)[c*Cout+co] = sum_c' s[c'*Cout+co].
    p = jnp.kron(jnp.ones((W, W), jnp.float32), jnp.eye(Cout, dtype=jnp.float32))
    gam = jnp.tile(gamma.astype(jnp.float32), W).reshape(1, WCout)
    bet = jnp.tile(beta.astype(jnp.float32), W).reshape(1, WCout)

    flops = 2 * N * H * WCin * WCout * 3 + 4 * WCout * WCout
    bytes_accessed = (xp.size * 2 + wt.size * 2 + p.size * 4
                      + 2 * WCout * 4 + N * H * WCout * 2)

    out = pl.pallas_call(
        functools.partial(_conv_bn_relu_kernel, width=W),
        out_shape=jax.ShapeDtypeStruct((N, H, WCout), jnp.bfloat16),
        grid=(1,),
        in_specs=[
            pl.BlockSpec((N, H + 2, WCin), lambda i: (0, 0, 0)),
            pl.BlockSpec((3, WCin, WCout), lambda i: (0, 0, 0)),
            pl.BlockSpec((WCout, WCout), lambda i: (0, 0)),
            pl.BlockSpec((1, WCout), lambda i: (0, 0)),
            pl.BlockSpec((1, WCout), lambda i: (0, 0)),
        ],
        out_specs=pl.BlockSpec((N, H, WCout), lambda i: (0, 0, 0)),
        compiler_params=pltpu.CompilerParams(dimension_semantics=("arbitrary",)),
        cost_estimate=pl.CostEstimate(flops=flops, transcendentals=WCout,
                                      bytes_accessed=bytes_accessed),
    )(xp, wt, p, gam, bet)

    return out.reshape(N, H, W, Cout)


# ----------------------------------------------------------------------------
# Plain-JAX reference for one block (used only for the in-script self check)
# ----------------------------------------------------------------------------
def _conv_bn_relu_reference(x, w, gamma, beta):
    y = jax.lax.conv_general_dilated(
        x.astype(jnp.float32), w.astype(jnp.float32), window_strides=(1, 1),
        padding="SAME", dimension_numbers=("NHWC", "HWIO", "NHWC"),
        precision=jax.lax.Precision.HIGHEST)
    mean = y.mean(axis=(0, 1, 2))
    var = y.var(axis=(0, 1, 2))
    yn = (y - mean) * jax.lax.rsqrt(var + 1e-5) * gamma + beta
    return jnp.maximum(yn, 0.0)


# ----------------------------------------------------------------------------
# UNet building blocks (small plain-JAX glue around the fused Pallas blocks)
# ----------------------------------------------------------------------------
def down_sample(x, p):
    conv = conv3x3_bn_relu(x, p["w"], p["gamma"], p["beta"])
    N, H, W, C = conv.shape
    pooled = conv.reshape(N, H // 2, 2, W // 2, 2, C).max(axis=(2, 4))  # MaxPool2d(2)
    return pooled, conv


def up_sample(x, skip, p):
    N, H, W, C = x.shape
    Hs, Ws = skip.shape[1], skip.shape[2]
    # nearest-neighbor F.interpolate(size=skip.shape[2:]): src = floor(i*in/out)
    hi = (jnp.arange(Hs) * H) // Hs
    wi = (jnp.arange(Ws) * W) // Ws
    xr = x[:, hi][:, :, wi]
    xc = jnp.concatenate([xr, skip.astype(xr.dtype)], axis=-1)
    return conv3x3_bn_relu(xc, p["w"], p["gamma"], p["beta"])


def _init_conv_block(key, cin, cout):
    scale = 1.0 / jnp.sqrt(9.0 * cin)
    # NOTE: no conv bias — train-mode BN subtracts the batch mean immediately
    # after the conv, so a per-channel bias cancels exactly.
    return dict(
        w=jax.random.uniform(key, (3, 3, cin, cout), jnp.float32, -scale, scale),
        gamma=jnp.ones((cout,), jnp.float32),
        beta=jnp.zeros((cout,), jnp.float32),
    )


def init_unet_params(key, in_ch, feature_size=8, depth=3, ratio=2):
    params = {"down": [], "up": []}
    keys = jax.random.split(key, (depth + 1) * 2 + 1)
    ki = 0

    down_io = [(in_ch, feature_size)] + [
        (feature_size * ratio ** d, feature_size * ratio ** (d + 1)) for d in range(depth)
    ]
    for cin, cout in down_io:
        params["down"].append(_init_conv_block(keys[ki], cin, cout)); ki += 1

    c = feature_size * ratio ** depth
    params["center"] = _init_conv_block(keys[ki], c, c); ki += 1

    up_io = [
        (feature_size * ratio ** (l + 1) * 2, feature_size * ratio ** l)
        for l in reversed(range(depth))
    ] + [(feature_size * 2, feature_size)]
    for cin, cout in up_io:
        params["up"].append(_init_conv_block(keys[ki], cin, cout)); ki += 1

    return params


def unet_forward(params, x_nchw):
    # NCHW -> NHWC, bf16 activations between layers (matmul inputs are bf16)
    x = jnp.transpose(x_nchw, (0, 2, 3, 1)).astype(jnp.bfloat16)

    d_outs = []
    for p in params["down"]:
        x, d_out = down_sample(x, p)
        d_outs.append(d_out)
    d_outs = list(reversed(d_outs))

    x, _ = down_sample(x, params["center"])

    for d, p in zip(d_outs, params["up"]):
        x = up_sample(x, d, p)

    # NHWC -> NCHW, f32 to match the PyTorch output convention
    return jnp.transpose(x, (0, 3, 1, 2)).astype(jnp.float32)


# ----------------------------------------------------------------------------
if __name__ == "__main__":
    key = jax.random.PRNGKey(0)
    kp, kx, kc, kcx = jax.random.split(key, 4)

    IN_CH, FEATURE_SIZE, DEPTH, RATIO = 2, 8, 3, 2
    N, H, W = 2, 32, 32  # spatial must be >= 2^(depth+2) for the pooling chain

    # --- single-block numerical self check against the plain-JAX reference ---
    blk = _init_conv_block(kc, 8, 16)
    w_q = blk["w"].astype(jnp.bfloat16).astype(jnp.float32)   # same effective weights
    xb = jax.random.normal(kcx, (2, 16, 16, 8), jnp.float32).astype(jnp.bfloat16)
    got = jax.jit(conv3x3_bn_relu)(xb, w_q, blk["gamma"], blk["beta"]).astype(jnp.float32)
    ref = _conv_bn_relu_reference(xb, w_q, blk["gamma"], blk["beta"])
    err = float(jnp.max(jnp.abs(got - ref)))
    assert err < 0.1, f"fused conv+BN+ReLU mismatch: max |err| = {err}"

    # --- full UNet forward ---
    params = init_unet_params(kp, IN_CH, FEATURE_SIZE, DEPTH, RATIO)
    x = jax.random.normal(kx, (N, IN_CH, H, W), dtype=jnp.float32)

    out = jax.jit(unet_forward)(params, x)
    out = jax.block_until_ready(out)

    assert out.shape == (N, FEATURE_SIZE, H, W), out.shape
    assert bool(jnp.all(jnp.isfinite(out)))
    print("KERNEL_OK")
</pallas_src>

<mosaic_0001>
module attributes {stable_mosaic.version = 11 : i64} {
  func.func @_conv_bn_relu_kernel(%arg0: i32, %arg1: memref<2x18x128xbf16, #tpu.memory_space<vmem>>, %arg2: memref<3x128x256xbf16, #tpu.memory_space<vmem>>, %arg3: memref<256x256xf32, #tpu.memory_space<vmem>>, %arg4: memref<1x256xf32, #tpu.memory_space<vmem>>, %arg5: memref<1x256xf32, #tpu.memory_space<vmem>>, %arg6: memref<2x16x256xbf16, #tpu.memory_space<vmem>>) attributes {dimension_semantics = [#tpu.dimension_semantics<arbitrary>], iteration_bounds = array<i64: 1>, scalar_prefetch = 0 : i64, scratch_operands = 0 : i64, tpu.core_type = #tpu.core_type<tc>, window_params = [{pipeline_mode = #tpu.pipeline_mode<synchronous>, transform_indices = @transform_0, window_bounds = array<i64: 2, 18, 128>}, {pipeline_mode = #tpu.pipeline_mode<synchronous>, transform_indices = @transform_1, window_bounds = array<i64: 3, 128, 256>}, {pipeline_mode = #tpu.pipeline_mode<synchronous>, transform_indices = @transform_2, window_bounds = array<i64: 256, 256>}, {pipeline_mode = #tpu.pipeline_mode<synchronous>, transform_indices = @transform_3, window_bounds = array<i64: 1, 256>}, {pipeline_mode = #tpu.pipeline_mode<synchronous>, transform_indices = @transform_4, window_bounds = array<i64: 1, 256>}, {pipeline_mode = #tpu.pipeline_mode<synchronous>, transform_indices = @transform_5, window_bounds = array<i64: 2, 16, 256>}]} {
    %cst = arith.constant 0.000000e+00 : f32
    %0 = vector.broadcast %cst : f32 to vector<1x256xf32>
    %cst_0 = arith.constant 0.000000e+00 : f32
    %1 = vector.broadcast %cst_0 : f32 to vector<16x256xf32>
    %c0 = arith.constant 0 : index
    %c0_1 = arith.constant 0 : index
    %c0_2 = arith.constant 0 : index
    %2 = vector.load %arg1[%c0, %c0_1, %c0_2] : memref<2x18x128xbf16, #tpu.memory_space<vmem>>, vector<1x16x128xbf16>
    %3 = vector.shape_cast %2 : vector<1x16x128xbf16> to vector<16x128xbf16>
    %c0_3 = arith.constant 0 : index
    %c0_4 = arith.constant 0 : index
    %c0_5 = arith.constant 0 : index
    %4 = vector.load %arg2[%c0_3, %c0_4, %c0_5] : memref<3x128x256xbf16, #tpu.memory_space<vmem>>, vector<1x128x256xbf16>
    %5 = vector.shape_cast %4 : vector<1x128x256xbf16> to vector<128x256xbf16>
    %cst_6 = arith.constant dense<0.000000e+00> : vector<16x256xf32>
    %6 = tpu.matmul %3, %5, %cst_6 {dimension_numbers = #tpu.dot_dimension_numbers<[1], [0], [0], [1], [0, 0, 1, 1], [], []>} : vector<16x128xbf16>, vector<128x256xbf16>, vector<16x256xf32> -> vector<16x256xf32>
    %7 = arith.addf %1, %6 : vector<16x256xf32>
    %c0_7 = arith.constant 0 : index
    %c1 = arith.constant 1 : index
    %c0_8 = arith.constant 0 : index
    %8 = vector.load %arg1[%c0_7, %c1, %c0_8] : memref<2x18x128xbf16, #tpu.memory_space<vmem>>, vector<1x16x128xbf16>
    %9 = vector.shape_cast %8 : vector<1x16x128xbf16> to vector<16x128xbf16>
    %c1_9 = arith.constant 1 : index
    %c0_10 = arith.constant 0 : index
    %c0_11 = arith.constant 0 : index
    %10 = vector.load %arg2[%c1_9, %c0_10, %c0_11] : memref<3x128x256xbf16, #tpu.memory_space<vmem>>, vector<1x128x256xbf16>
    %11 = vector.shape_cast %10 : vector<1x128x256xbf16> to vector<128x256xbf16>
    %cst_12 = arith.constant dense<0.000000e+00> : vector<16x256xf32>
    %12 = tpu.matmul %9, %11, %cst_12 {dimension_numbers = #tpu.dot_dimension_numbers<[1], [0], [0], [1], [0, 0, 1, 1], [], []>} : vector<16x128xbf16>, vector<128x256xbf16>, vector<16x256xf32> -> vector<16x256xf32>
    %13 = arith.addf %7, %12 : vector<16x256xf32>
    %c0_13 = arith.constant 0 : index
    %c2 = arith.constant 2 : index
    %c0_14 = arith.constant 0 : index
    %14 = vector.load %arg1[%c0_13, %c2, %c0_14] : memref<2x18x128xbf16, #tpu.memory_space<vmem>>, vector<1x16x128xbf16>
    %15 = vector.shape_cast %14 : vector<1x16x128xbf16> to vector<16x128xbf16>
    %c2_15 = arith.constant 2 : index
    %c0_16 = arith.constant 0 : index
    %c0_17 = arith.constant 0 : index
    %16 = vector.load %arg2[%c2_15, %c0_16, %c0_17] : memref<3x128x256xbf16, #tpu.memory_space<vmem>>, vector<1x128x256xbf16>
    %17 = vector.shape_cast %16 : vector<1x128x256xbf16> to vector<128x256xbf16>
    %cst_18 = arith.constant dense<0.000000e+00> : vector<16x256xf32>
    %18 = tpu.matmul %15, %17, %cst_18 {dimension_numbers = #tpu.dot_dimension_numbers<[1], [0], [0], [1], [0, 0, 1, 1], [], []>} : vector<16x128xbf16>, vector<128x256xbf16>, vector<16x256xf32> -> vector<16x256xf32>
    %19 = arith.addf %13, %18 : vector<16x256xf32>
    %cst_19 = arith.constant dense<0.000000e+00> : vector<256xf32>
    %20 = vector.multi_reduction <add>, %19, %cst_19 [0] : vector<16x256xf32> to vector<256xf32>
    %21 = vector.shape_cast %20 : vector<256xf32> to vector<1x256xf32>
    %22 = arith.addf %0, %21 : vector<1x256xf32>
    %cst_20 = arith.constant 0.000000e+00 : f32
    %23 = vector.broadcast %cst_20 : f32 to vector<16x256xf32>
    %c1_21 = arith.constant 1 : index
    %c0_22 = arith.constant 0 : index
    %c0_23 = arith.constant 0 : index
    %24 = vector.load %arg1[%c1_21, %c0_22, %c0_23] : memref<2x18x128xbf16, #tpu.memory_space<vmem>>, vector<1x16x128xbf16>
    %25 = vector.shape_cast %24 : vector<1x16x128xbf16> to vector<16x128xbf16>
    %c0_24 = arith.constant 0 : index
    %c0_25 = arith.constant 0 : index
    %c0_26 = arith.constant 0 : index
    %26 = vector.load %arg2[%c0_24, %c0_25, %c0_26] : memref<3x128x256xbf16, #tpu.memory_space<vmem>>, vector<1x128x256xbf16>
    %27 = vector.shape_cast %26 : vector<1x128x256xbf16> to vector<128x256xbf16>
    %cst_27 = arith.constant dense<0.000000e+00> : vector<16x256xf32>
    %28 = tpu.matmul %25, %27, %cst_27 {dimension_numbers = #tpu.dot_dimension_numbers<[1], [0], [0], [1], [0, 0, 1, 1], [], []>} : vector<16x128xbf16>, vector<128x256xbf16>, vector<16x256xf32> -> vector<16x256xf32>
    %29 = arith.addf %23, %28 : vector<16x256xf32>
    %c1_28 = arith.constant 1 : index
    %c1_29 = arith.constant 1 : index
    %c0_30 = arith.constant 0 : index
    %30 = vector.load %arg1[%c1_28, %c1_29, %c0_30] : memref<2x18x128xbf16, #tpu.memory_space<vmem>>, vector<1x16x128xbf16>
    %31 = vector.shape_cast %30 : vector<1x16x128xbf16> to vector<16x128xbf16>
    %c1_31 = arith.constant 1 : index
    %c0_32 = arith.constant 0 : index
    %c0_33 = arith.constant 0 : index
    %32 = vector.load %arg2[%c1_31, %c0_32, %c0_33] : memref<3x128x256xbf16, #tpu.memory_space<vmem>>, vector<1x128x256xbf16>
    %33 = vector.shape_cast %32 : vector<1x128x256xbf16> to vector<128x256xbf16>
    %cst_34 = arith.constant dense<0.000000e+00> : vector<16x256xf32>
    %34 = tpu.matmul %31, %33, %cst_34 {dimension_numbers = #tpu.dot_dimension_numbers<[1], [0], [0], [1], [0, 0, 1, 1], [], []>} : vector<16x128xbf16>, vector<128x256xbf16>, vector<16x256xf32> -> vector<16x256xf32>
    %35 = arith.addf %29, %34 : vector<16x256xf32>
    %c1_35 = arith.constant 1 : index
    %c2_36 = arith.constant 2 : index
    %c0_37 = arith.constant 0 : index
    %36 = vector.load %arg1[%c1_35, %c2_36, %c0_37] : memref<2x18x128xbf16, #tpu.memory_space<vmem>>, vector<1x16x128xbf16>
    %37 = vector.shape_cast %36 : vector<1x16x128xbf16> to vector<16x128xbf16>
    %c2_38 = arith.constant 2 : index
    %c0_39 = arith.constant 0 : index
    %c0_40 = arith.constant 0 : index
    %38 = vector.load %arg2[%c2_38, %c0_39, %c0_40] : memref<3x128x256xbf16, #tpu.memory_space<vmem>>, vector<1x128x256xbf16>
    %39 = vector.shape_cast %38 : vector<1x128x256xbf16> to vector<128x256xbf16>
    %cst_41 = arith.constant dense<0.000000e+00> : vector<16x256xf32>
    %40 = tpu.matmul %37, %39, %cst_41 {dimension_numbers = #tpu.dot_dimension_numbers<[1], [0], [0], [1], [0, 0, 1, 1], [], []>} : vector<16x128xbf16>, vector<128x256xbf16>, vector<16x256xf32> -> vector<16x256xf32>
    %41 = arith.addf %35, %40 : vector<16x256xf32>
    %cst_42 = arith.constant dense<0.000000e+00> : vector<256xf32>
    %42 = vector.multi_reduction <add>, %41, %cst_42 [0] : vector<16x256xf32> to vector<256xf32>
    %43 = vector.shape_cast %42 : vector<256xf32> to vector<1x256xf32>
    %44 = arith.addf %22, %43 : vector<1x256xf32>
    %c0_43 = arith.constant 0 : index
    %c0_44 = arith.constant 0 : index
    %45 = vector.load %arg3[%c0_43, %c0_44] : memref<256x256xf32, #tpu.memory_space<vmem>>, vector<256x256xf32>
    %cst_45 = arith.constant dense<0.000000e+00> : vector<1x256xf32>
    %46 = tpu.matmul %44, %45, %cst_45 {dimension_numbers = #tpu.dot_dimension_numbers<[1], [0], [0], [1], [0, 0, 1, 1], [], []>} : vector<1x256xf32>, vector<256x256xf32>, vector<1x256xf32> -> vector<1x256xf32>
    %cst_46 = arith.constant 0.001953125 : f32
    %47 = vector.broadcast %cst_46 : f32 to vector<1x256xf32>
    %48 = arith.mulf %46, %47 : vector<1x256xf32>
    %cst_47 = arith.constant 0.000000e+00 : f32
    %49 = vector.broadcast %cst_47 : f32 to vector<1x256xf32>
    %50 = vector.broadcast %48 : vector<1x256xf32> to vector<16x256xf32>
    %51 = arith.subf %19, %50 : vector<16x256xf32>
    %52 = arith.mulf %51, %51 : vector<16x256xf32>
    %cst_48 = arith.constant dense<0.000000e+00> : vector<256xf32>
    %53 = vector.multi_reduction <add>, %52, %cst_48 [0] : vector<16x256xf32> to vector<256xf32>
    %54 = vector.shape_cast %53 : vector<256xf32> to vector<1x256xf32>
    %55 = arith.addf %49, %54 : vector<1x256xf32>
    %56 = vector.broadcast %48 : vector<1x256xf32> to vector<16x256xf32>
    %57 = arith.subf %41, %56 : vector<16x256xf32>
    %58 = arith.mulf %57, %57 : vector<16x256xf32>
    %cst_49 = arith.constant dense<0.000000e+00> : vector<256xf32>
    %59 = vector.multi_reduction <add>, %58, %cst_49 [0] : vector<16x256xf32> to vector<256xf32>
    %60 = vector.shape_cast %59 : vector<256xf32> to vector<1x256xf32>
    %61 = arith.addf %55, %60 : vector<1x256xf32>
    %c0_50 = arith.constant 0 : index
    %c0_51 = arith.constant 0 : index
    %62 = vector.load %arg3[%c0_50, %c0_51] : memref<256x256xf32, #tpu.memory_space<vmem>>, vector<256x256xf32>
    %cst_52 = arith.constant dense<0.000000e+00> : vector<1x256xf32>
    %63 = tpu.matmul %61, %62, %cst_52 {dimension_numbers = #tpu.dot_dimension_numbers<[1], [0], [0], [1], [0, 0, 1, 1], [], []>} : vector<1x256xf32>, vector<256x256xf32>, vector<1x256xf32> -> vector<1x256xf32>
    %cst_53 = arith.constant 0.001953125 : f32
    %64 = vector.broadcast %cst_53 : f32 to vector<1x256xf32>
    %65 = arith.mulf %63, %64 : vector<1x256xf32>
    %c0_54 = arith.constant 0 : index
    %c0_55 = arith.constant 0 : index
    %66 = vector.load %arg4[%c0_54, %c0_55] : memref<1x256xf32, #tpu.memory_space<vmem>>, vector<1x256xf32>
    %cst_56 = arith.constant 9.99999974E-6 : f32
    %67 = vector.broadcast %cst_56 : f32 to vector<1x256xf32>
    %68 = arith.addf %65, %67 : vector<1x256xf32>
    %69 = math.rsqrt %68 : vector<1x256xf32>
    %70 = arith.mulf %66, %69 : vector<1x256xf32>
    %c0_57 = arith.constant 0 : index
    %c0_58 = arith.constant 0 : index
    %71 = vector.load %arg5[%c0_57, %c0_58] : memref<1x256xf32, #tpu.memory_space<vmem>>, vector<1x256xf32>
    %72 = arith.mulf %48, %70 : vector<1x256xf32>
    %73 = arith.subf %71, %72 : vector<1x256xf32>
    %74 = vector.broadcast %70 : vector<1x256xf32> to vector<16x256xf32>
    %75 = arith.mulf %19, %74 : vector<16x256xf32>
    %76 = vector.broadcast %73 : vector<1x256xf32> to vector<16x256xf32>
    %77 = arith.addf %75, %76 : vector<16x256xf32>
    %cst_59 = arith.constant 0.000000e+00 : f32
    %78 = vector.broadcast %cst_59 : f32 to vector<16x256xf32>
    %79 = arith.maximumf %77, %78 : vector<16x256xf32>
    %80 = arith.truncf %79 : vector<16x256xf32> to vector<16x256xbf16>
    %c0_60 = arith.constant 0 : index
    %c0_61 = arith.constant 0 : index
    %c0_62 = arith.constant 0 : index
    %81 = vector.load %arg6[%c0_60, %c0_61, %c0_62] : memref<2x16x256xbf16, #tpu.memory_space<vmem>>, vector<1x16x256xbf16>
    %82 = vector.shape_cast %81 : vector<1x16x256xbf16> to vector<16x256xbf16>
    %83 = vector.shape_cast %80 : vector<16x256xbf16> to vector<1x16x256xbf16>
    tpu.vector_store %arg6[%c0_60, %c0_61, %c0_62], %83 {strides = array<i32>} : memref<2x16x256xbf16, #tpu.memory_space<vmem>>, vector<1x16x256xbf16>,
    %84 = vector.broadcast %70 : vector<1x256xf32> to vector<16x256xf32>
    %85 = arith.mulf %41, %84 : vector<16x256xf32>
    %86 = vector.broadcast %73 : vector<1x256xf32> to vector<16x256xf32>
    %87 = arith.addf %85, %86 : vector<16x256xf32>
    %cst_63 = arith.constant 0.000000e+00 : f32
    %88 = vector.broadcast %cst_63 : f32 to vector<16x256xf32>
    %89 = arith.maximumf %87, %88 : vector<16x256xf32>
    %90 = arith.truncf %89 : vector<16x256xf32> to vector<16x256xbf16>
    %c1_64 = arith.constant 1 : index
    %c0_65 = arith.constant 0 : index
    %c0_66 = arith.constant 0 : index
    %91 = vector.load %arg6[%c1_64, %c0_65, %c0_66] : memref<2x16x256xbf16, #tpu.memory_space<vmem>>, vector<1x16x256xbf16>
    %92 = vector.shape_cast %91 : vector<1x16x256xbf16> to vector<16x256xbf16>
    %93 = vector.shape_cast %90 : vector<16x256xbf16> to vector<1x16x256xbf16>
    tpu.vector_store %arg6[%c1_64, %c0_65, %c0_66], %93 {strides = array<i32>} : memref<2x16x256xbf16, #tpu.memory_space<vmem>>, vector<1x16x256xbf16>,
    return
  }
  func.func @transform_0(%arg0: i32) -> (i32, i32, i32) {
    %c0_i32 = arith.constant 0 : i32
    %c0_i32_0 = arith.constant 0 : i32
    %c0_i32_1 = arith.constant 0 : i32
    %c0_i32_2 = arith.constant 0 : i32
    return %c0_i32, %c0_i32_0, %c0_i32_1 : i32, i32, i32
  }
  func.func @transform_1(%arg0: i32) -> (i32, i32, i32) {
    %c0_i32 = arith.constant 0 : i32
    %c0_i32_0 = arith.constant 0 : i32
    %c0_i32_1 = arith.constant 0 : i32
    %c0_i32_2 = arith.constant 0 : i32
    return %c0_i32, %c0_i32_0, %c0_i32_1 : i32, i32, i32
  }
  func.func @transform_2(%arg0: i32) -> (i32, i32) {
    %c0_i32 = arith.constant 0 : i32
    %c0_i32_0 = arith.constant 0 : i32
    %c0_i32_1 = arith.constant 0 : i32
    return %c0_i32, %c0_i32_0 : i32, i32
  }
  func.func @transform_3(%arg0: i32) -> (i32, i32) {
    %c0_i32 = arith.constant 0 : i32
    %c0_i32_0 = arith.constant 0 : i32
    %c0_i32_1 = arith.constant 0 : i32
    return %c0_i32, %c0_i32_0 : i32, i32
  }
  func.func @transform_4(%arg0: i32) -> (i32, i32) {
    %c0_i32 = arith.constant 0 : i32
    %c0_i32_0 = arith.constant 0 : i32
    %c0_i32_1 = arith.constant 0 : i32
    return %c0_i32, %c0_i32_0 : i32, i32
  }
  func.func @transform_5(%arg0: i32) -> (i32, i32, i32) {
    %c0_i32 = arith.constant 0 : i32
    %c0_i32_0 = arith.constant 0 : i32
    %c0_i32_1 = arith.constant 0 : i32
    %c0_i32_2 = arith.constant 0 : i32
    return %c0_i32, %c0_i32_0, %c0_i32_1 : i32, i32, i32
  }
}

</mosaic_0001>

<llo_original>
// kernel: tile.13
$region0: #{tile.13}
  #allocation0 [shape = 's32[1]{0}', space=sflag, size = 0x4, scoped, tag = 'scoped memory for tile.13']
  %s0 = inlined_call_operand.vmem [shape: f32[16], index: 0, kind: input, shape index: {}]
  %s1 = inlined_call_operand.vmem [shape: f32[16,16], index: 1, kind: output, shape index: {}]
  // Predicated region
  $region2: #{tile.13} parent=0 // pred_check
    _
  $region3: #{tile.13} parent=0 // pred_check_branch
    %3 = sbr.rel (0) target = $region5
  $region4: #{tile.13} parent=0 // pred_region
    _
  $region5: #{tile.13} parent=0 // pred_fallthru
    _
  %v4 = vld [vmem:[%s0] ss:$0 sm:$0xff]
  %5 = vst [vmem:[%s1] sm:$0xff] %v4
  %s6 = scalar_lea.vmem %s1, 8
  %7 = vst [vmem:[%s6] sm:$0xff] %v4

// kernel: tile.14
$region0: #{tile.14}
  %s0 = inlined_call_operand.vmem [shape: f32[16,16], index: 0, kind: input, shape index: {}]
  %s1 = inlined_call_operand.vmem [shape: f32[1,256], index: 1, kind: output, shape index: {}]
  $region1: #{tile.14} parent=0
    #allocation0 [shape = 'u8[8192]{0}', space=vmem, size = 0x2000, scoped, tag = 'scoped mem for output reshape']
    %s2 = smov 3
    %v3 = vld [vmem:[%s0] ss:$8 sm:%s2]
    %vm4 = vcmask 130048
    %5 = vst.msk [vmem:[#allocation0] ss:$8 sm:$0x3] %vm4, %v3
    %s6 = scalar_lea.vmem %s0, 7
    %s7 = smov 3
    %v8 = vld [vmem:[%s6] ss:$8 sm:%s7]
    %9 = vrot.lane.b32.xlu0 %v8, 112
    %v10 = vpop.permute.xlu0 %9
    %vm11 = vcmask 1048448
    %12 = vst.msk [vmem:[#allocation0] ss:$8 sm:$0x3] %vm11, %v10
    %s13 = scalar_lea.vmem %s0, 6
    %s14 = smov 3
    %v15 = vld [vmem:[%s13] ss:$8 sm:%s14]
    %16 = vrot.lane.b32.xlu0 %v15, 96
    %v17 = vpop.permute.xlu0 %16
    %vm18 = vcmask 917248
    %19 = vst.msk [vmem:[#allocation0] ss:$8 sm:$0x3] %vm18, %v17
    %s20 = scalar_lea.vmem %s0, 5
    %s21 = smov 3
    %v22 = vld [vmem:[%s20] ss:$8 sm:%s21]
    %23 = vrot.lane.b32.xlu0 %v22, 80
    %v24 = vpop.permute.xlu0 %23
    %vm25 = vcmask 786048
    %26 = vst.msk [vmem:[#allocation0] ss:$8 sm:$0x3] %vm25, %v24
    %s27 = scalar_lea.vmem %s0, 4
    %s28 = smov 3
    %v29 = vld [vmem:[%s27] ss:$8 sm:%s28]
    %30 = vrot.lane.b32.xlu0 %v29, 64
    %v31 = vpop.permute.xlu0 %30
    %vm32 = vcmask 654848
    %33 = vst.msk [vmem:[#allocation0] ss:$8 sm:$0x3] %vm32, %v31
    %s34 = scalar_lea.vmem %s0, 3
    %s35 = smov 3
    %v36 = vld [vmem:[%s34] ss:$8 sm:%s35]
    %37 = vrot.lane.b32.xlu0 %v36, 48
    %v38 = vpop.permute.xlu0 %37
    %vm39 = vcmask 523648
    %40 = vst.msk [vmem:[#allocation0] ss:$8 sm:$0x3] %vm39, %v38
    %s41 = scalar_lea.vmem %s0, 2
    %s42 = smov 3
    %v43 = vld [vmem:[%s41] ss:$8 sm:%s42]
    %44 = vrot.lane.b32.xlu0 %v43, 32
    %v45 = vpop.permute.xlu0 %44
    %vm46 = vcmask 392448
    %47 = vst.msk [vmem:[#allocation0] ss:$8 sm:$0x3] %vm46, %v45
    %s48 = scalar_lea.vmem %s0, 1
    %s49 = smov 3
    %v50 = vld [vmem:[%s48] ss:$8 sm:%s49]
    %51 = vrot.lane.b32.xlu0 %v50, 16
    %v52 = vpop.permute.xlu0 %51
    %vm53 = vcmask 261248
    %54 = vst.msk [vmem:[#allocation0] ss:$8 sm:$0x3] %vm53, %v52
    %s56 = sshllo.u32 0, 1
    %v58 = vld [vmem:[#allocation0] sm:%s56]
    %s59 = sshllo.u32 0, 1
    %60 = vst [vmem:[%s1] sm:%s59] %v58
    %s61 = scalar_lea.vmem [#allocation0], 8
    %v62 = vld [vmem:[%s61] sm:%s56]
    %s63 = sshllo.u32 0, 1
    %s64 = scalar_lea.vmem %s1, 1
    %65 = vst [vmem:[%s64] sm:%s63] %v62

// kernel: conv3x3_bn_relu.1
$region0: #{conv3x3_bn_relu.1}
  #allocation0 [shape = 'u32[]', space=smem, size = 0x4, offset = 0x4, fixed_abs, tag = 'smem constant byte address 0x4 - core index']
  #allocation1 [shape = 'u32[144,128]{1,0:T(1,128)}', space=vmem, size = 0x12000, scoped, tag = 'internal scratch']
  %s0 = inlined_call_operand.vmem [shape: bf16[2,18,128], index: 0, kind: input, shape index: {}]
  %s1 = inlined_call_operand.vmem [shape: bf16[3,128,256], index: 1, kind: input, shape index: {}]
  %s2 = inlined_call_operand.vmem [shape: f32[256,256], index: 2, kind: input, shape index: {}]
  %s3 = inlined_call_operand.vmem [shape: f32[1,256], index: 3, kind: input, shape index: {}]
  %s4 = inlined_call_operand.vmem [shape: f32[1,256], index: 4, kind: input, shape index: {}]
  %s5 = inlined_call_operand.vmem [shape: bf16[2,16,256], index: 5, kind: output, shape index: {}]
  %s6 = sld [smem:[#allocation0]]
  $region30: #{conv3x3_bn_relu.1} parent=0
    _
  %s8 = ssub.s32 1, %s6
  %s9 = scalar_select 0, %s8, %s6
  // Predicated region
  $region2: #{conv3x3_bn_relu.1} parent=0 // pred_check
    _
  $region3: #{conv3x3_bn_relu.1} parent=0 // pred_check_branch
    %11 = sbr.rel (0) target = $region5
  $region4: #{conv3x3_bn_relu.1} parent=0 // pred_region
    _
  $region5: #{conv3x3_bn_relu.1} parent=0 // pred_fallthru
    _
  // Predicated region
  $region6: #{conv3x3_bn_relu.1} parent=0 // pred_check
    _
  $region7: #{conv3x3_bn_relu.1} parent=0 // pred_check_branch
    %13 = sbr.rel (0) target = $region9
  $region8: #{conv3x3_bn_relu.1} parent=0 // pred_region
    _
  $region9: #{conv3x3_bn_relu.1} parent=0 // pred_fallthru
    _
  // Predicated region
  $region10: #{conv3x3_bn_relu.1} parent=0 // pred_check
    _
  $region11: #{conv3x3_bn_relu.1} parent=0 // pred_check_branch
    %15 = sbr.rel (0) target = $region13
  $region12: #{conv3x3_bn_relu.1} parent=0 // pred_region
    _
  $region13: #{conv3x3_bn_relu.1} parent=0 // pred_fallthru
    _
  // Predicated region
  $region14: #{conv3x3_bn_relu.1} parent=0 // pred_check
    _
  $region15: #{conv3x3_bn_relu.1} parent=0 // pred_check_branch
    %17 = sbr.rel (0) target = $region17
  $region16: #{conv3x3_bn_relu.1} parent=0 // pred_region
    _
  $region17: #{conv3x3_bn_relu.1} parent=0 // pred_fallthru
    _
  // Predicated region
  $region18: #{conv3x3_bn_relu.1} parent=0 // pred_check
    _
  $region19: #{conv3x3_bn_relu.1} parent=0 // pred_check_branch
    %19 = sbr.rel (0) target = $region21
  $region20: #{conv3x3_bn_relu.1} parent=0 // pred_region
    _
  $region21: #{conv3x3_bn_relu.1} parent=0 // pred_fallthru
    _
  %v21 = vld [vmem:[%s0] sm:$0xf]
  %v22 = vld [vmem:[%s0 + $0x4] sm:$0xf]
  %v23 = vld [vmem:[%s1] sm:$0xff]
  %v24 = vld [vmem:[%s1 + $0x8] sm:$0xff]
  %v25 = vld [vmem:[%s1 + $0x10] sm:$0xff]
  %v26 = vld [vmem:[%s1 + $0x18] sm:$0xff]
  %v27 = vld [vmem:[%s1 + $0x20] sm:$0xff]
  %v28 = vld [vmem:[%s1 + $0x28] sm:$0xff]
  %v29 = vld [vmem:[%s1 + $0x30] sm:$0xff]
  %v30 = vld [vmem:[%s1 + $0x38] sm:$0xff]
  %v31 = vld [vmem:[%s1 + $0x40] sm:$0xff]
  %v32 = vld [vmem:[%s1 + $0x48] sm:$0xff]
  %v33 = vld [vmem:[%s1 + $0x50] sm:$0xff]
  %v34 = vld [vmem:[%s1 + $0x58] sm:$0xff]
  %v35 = vld [vmem:[%s1 + $0x60] sm:$0xff]
  %v36 = vld [vmem:[%s1 + $0x68] sm:$0xff]
  %v37 = vld [vmem:[%s1 + $0x70] sm:$0xff]
  %v38 = vld [vmem:[%s1 + $0x78] sm:$0xff]
  %v39 = vld [vmem:[%s0 + $0x8] sm:$0x1]
  %s40 = scalar_lea.vmem %s1, 128
  %v41 = vld [vmem:[%s40] sm:$0xff]
  %v42 = vld [vmem:[%s40 + $0x8] sm:$0xff]
  %v43 = vld [vmem:[%s40 + $0x10] sm:$0xff]
  %v44 = vld [vmem:[%s40 + $0x18] sm:$0xff]
  %v45 = vld [vmem:[%s40 + $0x20] sm:$0xff]
  %v46 = vld [vmem:[%s40 + $0x28] sm:$0xff]
  %v47 = vld [vmem:[%s40 + $0x30] sm:$0xff]
  %v48 = vld [vmem:[%s40 + $0x38] sm:$0xff]
  %v49 = vld [vmem:[%s40 + $0x40] sm:$0xff]
  %v50 = vld [vmem:[%s40 + $0x48] sm:$0xff]
  %v51 = vld [vmem:[%s40 + $0x50] sm:$0xff]
  %v52 = vld [vmem:[%s40 + $0x58] sm:$0xff]
  %v53 = vld [vmem:[%s40 + $0x60] sm:$0xff]
  %v54 = vld [vmem:[%s40 + $0x68] sm:$0xff]
  %v55 = vld [vmem:[%s40 + $0x70] sm:$0xff]
  %v56 = vld [vmem:[%s40 + $0x78] sm:$0xff]
  %v60 = vunpack.c.l.b16 %v21
  %v61 = vunpack.c.l.b16 %v22
  %v62 = vunpack.c.l.b16 %v39
  %v63 = vpack.c.b16 %v61, %v60
  %v64 = vpack.c.b16 %v62, %v62
  %vm65 = vsmask.f32 7424
  %v67 = vshrl.u32 %v63, 16
  %v69 = vshll.u32 %v63, 16
  %v71 = vrot.slane %v69, 1
  %v72 = vor.u32 %v67, %v71
  %v74 = vshll.u32 %v64, 16
  %v76 = vrot.slane %v74, 1
  %v77 = vsel %vm65, %v72, %v76
  %v95 = vunpack.c.l.b16 %v41
  %v96 = vunpack.c.h.b16 %v41
  %v97 = vunpack.c.l.b16 %v42
  %v98 = vunpack.c.h.b16 %v42
  %v99 = vunpack.c.l.b16 %v43
  %v100 = vunpack.c.h.b16 %v43
  %v101 = vunpack.c.l.b16 %v44
  %v102 = vunpack.c.h.b16 %v44
  %v103 = vunpack.c.l.b16 %v45
  %v104 = vunpack.c.h.b16 %v45
  %v105 = vunpack.c.l.b16 %v46
  %v106 = vunpack.c.h.b16 %v46
  %v107 = vunpack.c.l.b16 %v47
  %v108 = vunpack.c.h.b16 %v47
  %v109 = vunpack.c.l.b16 %v48
  %v110 = vunpack.c.h.b16 %v48
  %v111 = vunpack.c.l.b16 %v49
  %v112 = vunpack.c.h.b16 %v49
  %v113 = vunpack.c.l.b16 %v50
  %v114 = vunpack.c.h.b16 %v50
  %v115 = vunpack.c.l.b16 %v51
  %v116 = vunpack.c.h.b16 %v51
  %v117 = vunpack.c.l.b16 %v52
  %v118 = vunpack.c.h.b16 %v52
  %v119 = vunpack.c.l.b16 %v53
  %v120 = vunpack.c.h.b16 %v53
  %v121 = vunpack.c.l.b16 %v54
  %v122 = vunpack.c.h.b16 %v54
  %v123 = vunpack.c.l.b16 %v55
  %v124 = vunpack.c.h.b16 %v55
  %v125 = vunpack.c.l.b16 %v56
  %v126 = vunpack.c.h.b16 %v56
  %v127 = vpack.c.b16 %v97, %v95
  %v128 = vpack.c.b16 %v98, %v96
  %v129 = vpack.c.b16 %v101, %v99
  %v130 = vpack.c.b16 %v102, %v100
  %v131 = vpack.c.b16 %v105, %v103
  %v132 = vpack.c.b16 %v106, %v104
  %v133 = vpack.c.b16 %v109, %v107
  %v134 = vpack.c.b16 %v110, %v108
  %v135 = vpack.c.b16 %v113, %v111
  %v136 = vpack.c.b16 %v114, %v112
  %v137 = vpack.c.b16 %v117, %v115
  %v138 = vpack.c.b16 %v118, %v116
  %v139 = vpack.c.b16 %v121, %v119
  %v140 = vpack.c.b16 %v122, %v120
  %v141 = vpack.c.b16 %v125, %v123
  %v142 = vpack.c.b16 %v126, %v124
  %159 = vmatprep.subr.bf16.mxu0 %v128
  %160 = vmatpush1.bf16.msra.mxu0 %v127
  %161 = vmatprep.subr.bf16.mxu0 %v130
  %162 = vmatpush1.bf16.msra.mxu0 %v129
  %163 = vmatprep.subr.bf16.mxu0 %v132
  %164 = vmatpush1.bf16.msra.mxu0 %v131
  %165 = vmatprep.subr.bf16.mxu0 %v134
  %166 = vmatpush1.bf16.msra.mxu0 %v133
  %167 = vmatprep.subr.bf16.mxu0 %v136
  %168 = vmatpush1.bf16.msra.mxu0 %v135
  %169 = vmatprep.subr.bf16.mxu0 %v138
  %170 = vmatpush1.bf16.msra.mxu0 %v137
  %171 = vmatprep.subr.bf16.mxu0 %v140
  %172 = vmatpush1.bf16.msra.mxu0 %v139
  %173 = vmatprep.subr.bf16.mxu0 %v142
  %174 = vmatpush1.bf16.msra.mxu0 %v141
  %175 = vmatprep.subr.bf16.mxu0 0
  %176 = vmatpush1.bf16.msra.mxu0 0
  %177 = vmatprep.subr.bf16.mxu0 0
  %178 = vmatpush1.bf16.msra.mxu0 0
  %179 = vmatprep.subr.bf16.mxu0 0
  %180 = vmatpush1.bf16.msra.mxu0 0
  %181 = vmatprep.subr.bf16.mxu0 0
  %182 = vmatpush1.bf16.msra.mxu0 0
  %183 = vmatprep.subr.bf16.mxu0 0
  %184 = vmatpush1.bf16.msra.mxu0 0
  %185 = vmatprep.subr.bf16.mxu0 0
  %186 = vmatpush1.bf16.msra.mxu0 0
  %187 = vmatprep.subr.bf16.mxu0 0
  %188 = vmatpush1.bf16.msra.mxu0 0
  %189 = vmatprep.subr.bf16.mxu0 0
  %190 = vmatpush1.bf16.msra.mxu0 0
  %191 = vmatprep.mubr.bf16.mxu0 0
  %192 = vmatmul.mubr.bf16.gmra.mrb[0].mxu0 %v77
  %v193 = vpop.f32.mrb[0].mxu0
  %v194 = vadd.f32 0.0, %v193
  %v195 = vpop.f32.mrb[0].mxu0
  %v196 = vadd.f32 0.0, %v195
  %v197 = vpop.f32.mrb[0].mxu0
  %v198 = vadd.f32 0.0, %v197
  %v199 = vpop.f32.mrb[0].mxu0
  %v200 = vadd.f32 0.0, %v199
  %201 = vdwg.mxu0
  %v219 = vunpack.c.l.b16 %v23
  %v220 = vunpack.c.h.b16 %v23
  %v221 = vunpack.c.l.b16 %v24
  %v222 = vunpack.c.h.b16 %v24
  %v223 = vunpack.c.l.b16 %v25
  %v224 = vunpack.c.h.b16 %v25
  %v225 = vunpack.c.l.b16 %v26
  %v226 = vunpack.c.h.b16 %v26
  %v227 = vunpack.c.l.b16 %v27
  %v228 = vunpack.c.h.b16 %v27
  %v229 = vunpack.c.l.b16 %v28
  %v230 = vunpack.c.h.b16 %v28
  %v231 = vunpack.c.l.b16 %v29
  %v232 = vunpack.c.h.b16 %v29
  %v233 = vunpack.c.l.b16 %v30
  %v234 = vunpack.c.h.b16 %v30
  %v235 = vunpack.c.l.b16 %v31
  %v236 = vunpack.c.h.b16 %v31
  %v237 = vunpack.c.l.b16 %v32
  %v238 = vunpack.c.h.b16 %v32
  %v239 = vunpack.c.l.b16 %v33
  %v240 = vunpack.c.h.b16 %v33
  %v241 = vunpack.c.l.b16 %v34
  %v242 = vunpack.c.h.b16 %v34
  %v243 = vunpack.c.l.b16 %v35
  %v244 = vunpack.c.h.b16 %v35
  %v245 = vunpack.c.l.b16 %v36
  %v246 = vunpack.c.h.b16 %v36
  %v247 = vunpack.c.l.b16 %v37
  %v248 = vunpack.c.h.b16 %v37
  %v249 = vunpack.c.l.b16 %v38
  %v250 = vunpack.c.h.b16 %v38
  %v251 = vpack.c.b16 %v221, %v219
  %v252 = vpack.c.b16 %v222, %v220
  %v253 = vpack.c.b16 %v225, %v223
  %v254 = vpack.c.b16 %v226, %v224
  %v255 = vpack.c.b16 %v229, %v227
  %v256 = vpack.c.b16 %v230, %v228
  %v257 = vpack.c.b16 %v233, %v231
  %v258 = vpack.c.b16 %v234, %v232
  %v259 = vpack.c.b16 %v237, %v235
  %v260 = vpack.c.b16 %v238, %v236
  %v261 = vpack.c.b16 %v241, %v239
  %v262 = vpack.c.b16 %v242, %v240
  %v263 = vpack.c.b16 %v245, %v243
  %v264 = vpack.c.b16 %v246, %v244
  %v265 = vpack.c.b16 %v249, %v247
  %v266 = vpack.c.b16 %v250, %v248
  %283 = vmatprep.subr.bf16.mxu0 %v252
  %284 = vmatpush1.bf16.msra.mxu0 %v251
  %285 = vmatprep.subr.bf16.mxu0 %v254
  %286 = vmatpush1.bf16.msra.mxu0 %v253
  %287 = vmatprep.subr.bf16.mxu0 %v256
  %288 = vmatpush1.bf16.msra.mxu0 %v255
  %289 = vmatprep.subr.bf16.mxu0 %v258
  %290 = vmatpush1.bf16.msra.mxu0 %v257
  %291 = vmatprep.subr.bf16.mxu0 %v260
  %292 = vmatpush1.bf16.msra.mxu0 %v259
  %293 = vmatprep.subr.bf16.mxu0 %v262
  %294 = vmatpush1.bf16.msra.mxu0 %v261
  %295 = vmatprep.subr.bf16.mxu0 %v264
  %296 = vmatpush1.bf16.msra.mxu0 %v263
  %297 = vmatprep.subr.bf16.mxu0 %v266
  %298 = vmatpush1.bf16.msra.mxu0 %v265
  %299 = vmatprep.subr.bf16.mxu0 0
  %300 = vmatpush1.bf16.msra.mxu0 0
  %301 = vmatprep.subr.bf16.mxu0 0
  %302 = vmatpush1.bf16.msra.mxu0 0
  %303 = vmatprep.subr.bf16.mxu0 0
  %304 = vmatpush1.bf16.msra.mxu0 0
  %305 = vmatprep.subr.bf16.mxu0 0
  %306 = vmatpush1.bf16.msra.mxu0 0
  %307 = vmatprep.subr.bf16.mxu0 0
  %308 = vmatpush1.bf16.msra.mxu0 0
  %309 = vmatprep.subr.bf16.mxu0 0
  %310 = vmatpush1.bf16.msra.mxu0 0
  %311 = vmatprep.subr.bf16.mxu0 0
  %312 = vmatpush1.bf16.msra.mxu0 0
  %313 = vmatprep.subr.bf16.mxu0 0
  %314 = vmatpush1.bf16.msra.mxu0 0
  %315 = vmatprep.mubr.bf16.mxu0 0
  %316 = vmatmul.mubr.bf16.gmra.mrb[0].mxu0 %v63
  %v317 = vpop.f32.mrb[0].mxu0
  %v318 = vadd.f32 %v194, %v317
  %v319 = vpop.f32.mrb[0].mxu0
  %v320 = vadd.f32 %v196, %v319
  %v321 = vpop.f32.mrb[0].mxu0
  %v322 = vadd.f32 %v198, %v321
  %v323 = vpop.f32.mrb[0].mxu0
  %v324 = vadd.f32 %v200, %v323
  %325 = vdwg.mxu0
  %v326 = vld [vmem:[%s0] sm:$0xe]
  %s327 = scalar_lea.vmem %s1, 256
  %v328 = vld [vmem:[%s327] sm:$0xff]
  %v329 = vld [vmem:[%s327 + $0x8] sm:$0xff]
  %v330 = vld [vmem:[%s327 + $0x10] sm:$0xff]
  %v331 = vld [vmem:[%s327 + $0x18] sm:$0xff]
  %v332 = vld [vmem:[%s327 + $0x20] sm:$0xff]
  %v333 = vld [vmem:[%s327 + $0x28] sm:$0xff]
  %v334 = vld [vmem:[%s327 + $0x30] sm:$0xff]
  %v335 = vld [vmem:[%s327 + $0x38] sm:$0xff]
  %v336 = vld [vmem:[%s327 + $0x40] sm:$0xff]
  %v337 = vld [vmem:[%s327 + $0x48] sm:$0xff]
  %v338 = vld [vmem:[%s327 + $0x50] sm:$0xff]
  %v339 = vld [vmem:[%s327 + $0x58] sm:$0xff]
  %v340 = vld [vmem:[%s327 + $0x60] sm:$0xff]
  %v341 = vld [vmem:[%s327 + $0x68] sm:$0xff]
  %v342 = vld [vmem:[%s327 + $0x70] sm:$0xff]
  %v343 = vld [vmem:[%s327 + $0x78] sm:$0xff]
  %v345 = vunpack.c.l.b16 %v326
  %v346 = vpack.c.b16 %v61, %v345
  %vm347 = vcmask 1046528
  %v348 = vrot.slane %v346, 1
  %v349 = vrot.slane %v64, 1
  %v350 = vsel %vm347, %v348, %v349
  %v368 = vunpack.c.l.b16 %v328
  %v369 = vunpack.c.h.b16 %v328
  %v370 = vunpack.c.l.b16 %v329
  %v371 = vunpack.c.h.b16 %v329
  %v372 = vunpack.c.l.b16 %v330
  %v373 = vunpack.c.h.b16 %v330
  %v374 = vunpack.c.l.b16 %v331
  %v375 = vunpack.c.h.b16 %v331
  %v376 = vunpack.c.l.b16 %v332
  %v377 = vunpack.c.h.b16 %v332
  %v378 = vunpack.c.l.b16 %v333
  %v379 = vunpack.c.h.b16 %v333
  %v380 = vunpack.c.l.b16 %v334
  %v381 = vunpack.c.h.b16 %v334
  %v382 = vunpack.c.l.b16 %v335
  %v383 = vunpack.c.h.b16 %v335
  %v384 = vunpack.c.l.b16 %v336
  %v385 = vunpack.c.h.b16 %v336
  %v386 = vunpack.c.l.b16 %v337
  %v387 = vunpack.c.h.b16 %v337
  %v388 = vunpack.c.l.b16 %v338
  %v389 = vunpack.c.h.b16 %v338
  %v390 = vunpack.c.l.b16 %v339
  %v391 = vunpack.c.h.b16 %v339
  %v392 = vunpack.c.l.b16 %v340
  %v393 = vunpack.c.h.b16 %v340
  %v394 = vunpack.c.l.b16 %v341
  %v395 = vunpack.c.h.b16 %v341
  %v396 = vunpack.c.l.b16 %v342
  %v397 = vunpack.c.h.b16 %v342
  %v398 = vunpack.c.l.b16 %v343
  %v399 = vunpack.c.h.b16 %v343
  %v400 = vpack.c.b16 %v370, %v368
  %v401 = vpack.c.b16 %v371, %v369
  %v402 = vpack.c.b16 %v374, %v372
  %v403 = vpack.c.b16 %v375, %v373
  %v404 = vpack.c.b16 %v378, %v376
  %v405 = vpack.c.b16 %v379, %v377
  %v406 = vpack.c.b16 %v382, %v380
  %v407 = vpack.c.b16 %v383, %v381
  %v408 = vpack.c.b16 %v386, %v384
  %v409 = vpack.c.b16 %v387, %v385
  %v410 = vpack.c.b16 %v390, %v388
  %v411 = vpack.c.b16 %v391, %v389
  %v412 = vpack.c.b16 %v394, %v392
  %v413 = vpack.c.b16 %v395, %v393
  %v414 = vpack.c.b16 %v398, %v396
  %v415 = vpack.c.b16 %v399, %v397
  %432 = vmatprep.subr.bf16.mxu0 %v401
  %433 = vmatpush1.bf16.msra.mxu0 %v400
  %434 = vmatprep.subr.bf16.mxu0 %v403
  %435 = vmatpush1.bf16.msra.mxu0 %v402
  %436 = vmatprep.subr.bf16.mxu0 %v405
  %437 = vmatpush1.bf16.msra.mxu0 %v404
  %438 = vmatprep.subr.bf16.mxu0 %v407
  %439 = vmatpush1.bf16.msra.mxu0 %v406
  %440 = vmatprep.subr.bf16.mxu0 %v409
  %441 = vmatpush1.bf16.msra.mxu0 %v408
  %442 = vmatprep.subr.bf16.mxu0 %v411
  %443 = vmatpush1.bf16.msra.mxu0 %v410
  %444 = vmatprep.subr.bf16.mxu0 %v413
  %445 = vmatpush1.bf16.msra.mxu0 %v412
  %446 = vmatprep.subr.bf16.mxu0 %v415
  %447 = vmatpush1.bf16.msra.mxu0 %v414
  %448 = vmatprep.subr.bf16.mxu0 0
  %449 = vmatpush1.bf16.msra.mxu0 0
  %450 = vmatprep.subr.bf16.mxu0 0
  %451 = vmatpush1.bf16.msra.mxu0 0
  %452 = vmatprep.subr.bf16.mxu0 0
  %453 = vmatpush1.bf16.msra.mxu0 0
  %454 = vmatprep.subr.bf16.mxu0 0
  %455 = vmatpush1.bf16.msra.mxu0 0
  %456 = vmatprep.subr.bf16.mxu0 0
  %457 = vmatpush1.bf16.msra.mxu0 0
  %458 = vmatprep.subr.bf16.mxu0 0
  %459 = vmatpush1.bf16.msra.mxu0 0
  %460 = vmatprep.subr.bf16.mxu0 0
  %461 = vmatpush1.bf16.msra.mxu0 0
  %462 = vmatprep.subr.bf16.mxu0 0
  %463 = vmatpush1.bf16.msra.mxu0 0
  %464 = vmatprep.mubr.bf16.mxu0 0
  %465 = vmatmul.mubr.bf16.gmra.mrb[0].mxu0 %v350
  %v466 = vpop.f32.mrb[0].mxu0
  %v467 = vadd.f32 0.0, %v466
  %v468 = vpop.f32.mrb[0].mxu0
  %v469 = vadd.f32 0.0, %v468
  %v470 = vpop.f32.mrb[0].mxu0
  %v471 = vadd.f32 0.0, %v470
  %v472 = vpop.f32.mrb[0].mxu0
  %v473 = vadd.f32 0.0, %v472
  %474 = vdwg.mxu0
  %v475 = vadd.f32 %v318, %v467
  %v476 = vadd.f32 %v320, %v469
  %v477 = vadd.f32 %v322, %v471
  %v478 = vadd.f32 %v324, %v473
  %v479 = vadd.f32 %v475, %v477
  %v480 = vrot.slane %v479, 4
  %v481 = vadd.f32 %v479, %v480
  %v482 = vrot.slane %v481, 2
  %v483 = vadd.f32 %v481, %v482
  %v484 = vrot.slane %v483, 1
  %v485 = vadd.f32 %v483, %v484
  %v486 = vadd.f32 %v476, %v478
  %v487 = vrot.slane %v486, 4
  %v488 = vadd.f32 %v486, %v487
  %v489 = vrot.slane %v488, 2
  %v490 = vadd.f32 %v488, %v489
  %v491 = vrot.slane %v490, 1
  %v492 = vadd.f32 %v490, %v491
  %v493 = vadd.f32 %v485, 0.0
  %v494 = vadd.f32 %v492, 0.0
  %s495 = scalar_lea.vmem %s0, 12
  %v496 = vld [vmem:[%s495] sm:$0xf]
  %v497 = vld [vmem:[%s495 + $0x4] sm:$0xf]
  %v498 = vld [vmem:[%s495 + $0x8] sm:$0x1]
  %v502 = vunpack.c.l.b16 %v496
  %v503 = vunpack.c.l.b16 %v497
  %v504 = vunpack.c.l.b16 %v498
  %v505 = vpack.c.b16 %v503, %v502
  %v506 = vpack.c.b16 %v504, %v504
  %v508 = vshrl.u32 %v505, 16
  %v510 = vshll.u32 %v505, 16
  %v512 = vrot.slane %v510, 1
  %v513 = vor.u32 %v508, %v512
  %v515 = vshll.u32 %v506, 16
  %v517 = vrot.slane %v515, 1
  %v518 = vsel %vm65, %v513, %v517
  %520 = vmatprep.subr.bf16.mxu0 %v128
  %521 = vmatpush1.bf16.msra.mxu0 %v127
  %522 = vmatprep.subr.bf16.mxu0 %v130
  %523 = vmatpush1.bf16.msra.mxu0 %v129
  %524 = vmatprep.subr.bf16.mxu0 %v132
  %525 = vmatpush1.bf16.msra.mxu0 %v131
  %526 = vmatprep.subr.bf16.mxu0 %v134
  %527 = vmatpush1.bf16.msra.mxu0 %v133
  %528 = vmatprep.subr.bf16.mxu0 %v136
  %529 = vmatpush1.bf16.msra.mxu0 %v135
  %530 = vmatprep.subr.bf16.mxu0 %v138
  %531 = vmatpush1.bf16.msra.mxu0 %v137
  %532 = vmatprep.subr.bf16.mxu0 %v140
  %533 = vmatpush1.bf16.msra.mxu0 %v139
  %534 = vmatprep.subr.bf16.mxu0 %v142
  %535 = vmatpush1.bf16.msra.mxu0 %v141
  %536 = vmatprep.subr.bf16.mxu0 0
  %537 = vmatpush1.bf16.msra.mxu0 0
  %538 = vmatprep.subr.bf16.mxu0 0
  %539 = vmatpush1.bf16.msra.mxu0 0
  %540 = vmatprep.subr.bf16.mxu0 0
  %541 = vmatpush1.bf16.msra.mxu0 0
  %542 = vmatprep.subr.bf16.mxu0 0
  %543 = vmatpush1.bf16.msra.mxu0 0
  %544 = vmatprep.subr.bf16.mxu0 0
  %545 = vmatpush1.bf16.msra.mxu0 0
  %546 = vmatprep.subr.bf16.mxu0 0
  %547 = vmatpush1.bf16.msra.mxu0 0
  %548 = vmatprep.subr.bf16.mxu0 0
  %549 = vmatpush1.bf16.msra.mxu0 0
  %550 = vmatprep.subr.bf16.mxu0 0
  %551 = vmatpush1.bf16.msra.mxu0 0
  %552 = vmatprep.mubr.bf16.mxu0 0
  %553 = vmatmul.mubr.bf16.gmra.mrb[0].mxu0 %v518
  %v554 = vpop.f32.mrb[0].mxu0
  %v555 = vadd.f32 0.0, %v554
  %v556 = vpop.f32.mrb[0].mxu0
  %v557 = vadd.f32 0.0, %v556
  %v558 = vpop.f32.mrb[0].mxu0
  %v559 = vadd.f32 0.0, %v558
  %v560 = vpop.f32.mrb[0].mxu0
  %v561 = vadd.f32 0.0, %v560
  %562 = vdwg.mxu0
  %564 = vmatprep.subr.bf16.mxu0 %v252
  %565 = vmatpush1.bf16.msra.mxu0 %v251
  %566 = vmatprep.subr.bf16.mxu0 %v254
  %567 = vmatpush1.bf16.msra.mxu0 %v253
  %568 = vmatprep.subr.bf16.mxu0 %v256
  %569 = vmatpush1.bf16.msra.mxu0 %v255
  %570 = vmatprep.subr.bf16.mxu0 %v258
  %571 = vmatpush1.bf16.msra.mxu0 %v257
  %572 = vmatprep.subr.bf16.mxu0 %v260
  %573 = vmatpush1.bf16.msra.mxu0 %v259
  %574 = vmatprep.subr.bf16.mxu0 %v262
  %575 = vmatpush1.bf16.msra.mxu0 %v261
  %576 = vmatprep.subr.bf16.mxu0 %v264
  %577 = vmatpush1.bf16.msra.mxu0 %v263
  %578 = vmatprep.subr.bf16.mxu0 %v266
  %579 = vmatpush1.bf16.msra.mxu0 %v265
  %580 = vmatprep.subr.bf16.mxu0 0
  %581 = vmatpush1.bf16.msra.mxu0 0
  %582 = vmatprep.subr.bf16.mxu0 0
  %583 = vmatpush1.bf16.msra.mxu0 0
  %584 = vmatprep.subr.bf16.mxu0 0
  %585 = vmatpush1.bf16.msra.mxu0 0
  %586 = vmatprep.subr.bf16.mxu0 0
  %587 = vmatpush1.bf16.msra.mxu0 0
  %588 = vmatprep.subr.bf16.mxu0 0
  %589 = vmatpush1.bf16.msra.mxu0 0
  %590 = vmatprep.subr.bf16.mxu0 0
  %591 = vmatpush1.bf16.msra.mxu0 0
  %592 = vmatprep.subr.bf16.mxu0 0
  %593 = vmatpush1.bf16.msra.mxu0 0
  %594 = vmatprep.subr.bf16.mxu0 0
  %595 = vmatpush1.bf16.msra.mxu0 0
  %596 = vmatprep.mubr.bf16.mxu0 0
  %597 = vmatmul.mubr.bf16.gmra.mrb[0].mxu0 %v505
  %v598 = vpop.f32.mrb[0].mxu0
  %v599 = vadd.f32 %v555, %v598
  %v600 = vpop.f32.mrb[0].mxu0
  %v601 = vadd.f32 %v557, %v600
  %v602 = vpop.f32.mrb[0].mxu0
  %v603 = vadd.f32 %v559, %v602
  %v604 = vpop.f32.mrb[0].mxu0
  %v605 = vadd.f32 %v561, %v604
  %606 = vdwg.mxu0
  %v607 = vld [vmem:[%s495] sm:$0xe]
  %v609 = vunpack.c.l.b16 %v607
  %v610 = vpack.c.b16 %v503, %v609
  %v611 = vrot.slane %v610, 1
  %v612 = vrot.slane %v506, 1
  %v613 = vsel %vm347, %v611, %v612
  %615 = vmatprep.subr.bf16.mxu0 %v401
  %616 = vmatpush1.bf16.msra.mxu0 %v400
  %617 = vmatprep.subr.bf16.mxu0 %v403
  %618 = vmatpush1.bf16.msra.mxu0 %v402
  %619 = vmatprep.subr.bf16.mxu0 %v405
  %620 = vmatpush1.bf16.msra.mxu0 %v404
  %621 = vmatprep.subr.bf16.mxu0 %v407
  %622 = vmatpush1.bf16.msra.mxu0 %v406
  %623 = vmatprep.subr.bf16.mxu0 %v409
  %624 = vmatpush1.bf16.msra.mxu0 %v408
  %625 = vmatprep.subr.bf16.mxu0 %v411
  %626 = vmatpush1.bf16.msra.mxu0 %v410
  %627 = vmatprep.subr.bf16.mxu0 %v413
  %628 = vmatpush1.bf16.msra.mxu0 %v412
  %629 = vmatprep.subr.bf16.mxu0 %v415
  %630 = vmatpush1.bf16.msra.mxu0 %v414
  %631 = vmatprep.subr.bf16.mxu0 0
  %632 = vmatpush1.bf16.msra.mxu0 0
  %633 = vmatprep.subr.bf16.mxu0 0
  %634 = vmatpush1.bf16.msra.mxu0 0
  %635 = vmatprep.subr.bf16.mxu0 0
  %636 = vmatpush1.bf16.msra.mxu0 0
  %637 = vmatprep.subr.bf16.mxu0 0
  %638 = vmatpush1.bf16.msra.mxu0 0
  %639 = vmatprep.subr.bf16.mxu0 0
  %640 = vmatpush1.bf16.msra.mxu0 0
  %641 = vmatprep.subr.bf16.mxu0 0
  %642 = vmatpush1.bf16.msra.mxu0 0
  %643 = vmatprep.subr.bf16.mxu0 0
  %644 = vmatpush1.bf16.msra.mxu0 0
  %645 = vmatprep.subr.bf16.mxu0 0
  %646 = vmatpush1.bf16.msra.mxu0 0
  %647 = vmatprep.mubr.bf16.mxu0 0
  %648 = vmatmul.mubr.bf16.gmra.mrb[0].mxu0 %v613
  %v649 = vpop.f32.mrb[0].mxu0
  %v650 = vadd.f32 0.0, %v649
  %v651 = vpop.f32.mrb[0].mxu0
  %v652 = vadd.f32 0.0, %v651
  %v653 = vpop.f32.mrb[0].mxu0
  %v654 = vadd.f32 0.0, %v653
  %v655 = vpop.f32.mrb[0].mxu0
  %v656 = vadd.f32 0.0, %v655
  %657 = vdwg.mxu0
  %v658 = vadd.f32 %v599, %v650
  %v659 = vadd.f32 %v601, %v652
  %v660 = vadd.f32 %v603, %v654
  %v661 = vadd.f32 %v605, %v656
  %v662 = vadd.f32 %v658, %v660
  %v663 = vrot.slane %v662, 4
  %v664 = vadd.f32 %v662, %v663
  %v665 = vrot.slane %v664, 2
  %v666 = vadd.f32 %v664, %v665
  %v667 = vrot.slane %v666, 1
  %v668 = vadd.f32 %v666, %v667
  %v669 = vadd.f32 %v659, %v661
  %v670 = vrot.slane %v669, 4
  %v671 = vadd.f32 %v669, %v670
  %v672 = vrot.slane %v671, 2
  %v673 = vadd.f32 %v671, %v672
  %v674 = vrot.slane %v673, 1
  %v675 = vadd.f32 %v673, %v674
  %v676 = vadd.f32 %v493, %v668
  %v677 = vadd.f32 %v494, %v675
  %v678 = vld [vmem:[%s2] sm:$0xff]
  %v679 = vld [vmem:[%s2 + $0x8] sm:$0xff]
  %v680 = vld [vmem:[%s2 + $0x10] sm:$0xff]
  %v681 = vld [vmem:[%s2 + $0x18] sm:$0xff]
  %v682 = vld [vmem:[%s2 + $0x20] sm:$0xff]
  %v683 = vld [vmem:[%s2 + $0x28] sm:$0xff]
  %v684 = vld [vmem:[%s2 + $0x30] sm:$0xff]
  %v685 = vld [vmem:[%s2 + $0x38] sm:$0xff]
  %v686 = vld [vmem:[%s2 + $0x40] sm:$0xff]
  %v687 = vld [vmem:[%s2 + $0x48] sm:$0xff]
  %v688 = vld [vmem:[%s2 + $0x50] sm:$0xff]
  %v689 = vld [vmem:[%s2 + $0x58] sm:$0xff]
  %v690 = vld [vmem:[%s2 + $0x60] sm:$0xff]
  %v691 = vld [vmem:[%s2 + $0x68] sm:$0xff]
  %v692 = vld [vmem:[%s2 + $0x70] sm:$0xff]
  %v693 = vld [vmem:[%s2 + $0x78] sm:$0xff]
  %v694 = vld [vmem:[%s2 + $0x80] sm:$0xff]
  %v695 = vld [vmem:[%s2 + $0x88] sm:$0xff]
  %v696 = vld [vmem:[%s2 + $0x90] sm:$0xff]
  %v697 = vld [vmem:[%s2 + $0x98] sm:$0xff]
  %v698 = vld [vmem:[%s2 + $0xa0] sm:$0xff]
  %v699 = vld [vmem:[%s2 + $0xa8] sm:$0xff]
  %v700 = vld [vmem:[%s2 + $0xb0] sm:$0xff]
  %v701 = vld [vmem:[%s2 + $0xb8] sm:$0xff]
  %v702 = vld [vmem:[%s2 + $0xc0] sm:$0xff]
  %v703 = vld [vmem:[%s2 + $0xc8] sm:$0xff]
  %v704 = vld [vmem:[%s2 + $0xd0] sm:$0xff]
  %v705 = vld [vmem:[%s2 + $0xd8] sm:$0xff]
  %v706 = vld [vmem:[%s2 + $0xe0] sm:$0xff]
  %v707 = vld [vmem:[%s2 + $0xe8] sm:$0xff]
  %v708 = vld [vmem:[%s2 + $0xf0] sm:$0xff]
  %v709 = vld [vmem:[%s2 + $0xf8] sm:$0xff]
  %v710 = vld [vmem:[%s2 + $0x100] sm:$0xff]
  %v711 = vld [vmem:[%s2 + $0x108] sm:$0xff]
  %v712 = vld [vmem:[%s2 + $0x110] sm:$0xff]
  %v713 = vld [vmem:[%s2 + $0x118] sm:$0xff]
  %v714 = vld [vmem:[%s2 + $0x120] sm:$0xff]
  %v715 = vld [vmem:[%s2 + $0x128] sm:$0xff]
  %v716 = vld [vmem:[%s2 + $0x130] sm:$0xff]
  %v717 = vld [vmem:[%s2 + $0x138] sm:$0xff]
  %v718 = vld [vmem:[%s2 + $0x140] sm:$0xff]
  %v719 = vld [vmem:[%s2 + $0x148] sm:$0xff]
  %v720 = vld [vmem:[%s2 + $0x150] sm:$0xff]
  %v721 = vld [vmem:[%s2 + $0x158] sm:$0xff]
  %v722 = vld [vmem:[%s2 + $0x160] sm:$0xff]
  %v723 = vld [vmem:[%s2 + $0x168] sm:$0xff]
  %v724 = vld [vmem:[%s2 + $0x170] sm:$0xff]
  %v725 = vld [vmem:[%s2 + $0x178] sm:$0xff]
  %v726 = vld [vmem:[%s2 + $0x180] sm:$0xff]
  %v727 = vld [vmem:[%s2 + $0x188] sm:$0xff]
  %v728 = vld [vmem:[%s2 + $0x190] sm:$0xff]
  %v729 = vld [vmem:[%s2 + $0x198] sm:$0xff]
  %v730 = vld [vmem:[%s2 + $0x1a0] sm:$0xff]
  %v731 = vld [vmem:[%s2 + $0x1a8] sm:$0xff]
  %v732 = vld [vmem:[%s2 + $0x1b0] sm:$0xff]
  %v733 = vld [vmem:[%s2 + $0x1b8] sm:$0xff]
  %v734 = vld [vmem:[%s2 + $0x1c0] sm:$0xff]
  %v735 = vld [vmem:[%s2 + $0x1c8] sm:$0xff]
  %v736 = vld [vmem:[%s2 + $0x1d0] sm:$0xff]
  %v737 = vld [vmem:[%s2 + $0x1d8] sm:$0xff]
  %v738 = vld [vmem:[%s2 + $0x1e0] sm:$0xff]
  %v739 = vld [vmem:[%s2 + $0x1e8] sm:$0xff]
  %v740 = vld [vmem:[%s2 + $0x1f0] sm:$0xff]
  %v741 = vld [vmem:[%s2 + $0x1f8] sm:$0xff]
  %742 = vmatprep.subr.mxu0 %v679
  %743 = vmatpush1.msra.mxu0 %v678
  %744 = vmatprep.subr.mxu0 %v681
  %745 = vmatpush1.msra.mxu0 %v680
  %746 = vmatprep.subr.mxu0 %v683
  %747 = vmatpush1.msra.mxu0 %v682
  %748 = vmatprep.subr.mxu0 %v685
  %749 = vmatpush1.msra.mxu0 %v684
  %750 = vmatprep.subr.mxu0 %v687
  %751 = vmatpush1.msra.mxu0 %v686
  %752 = vmatprep.subr.mxu0 %v689
  %753 = vmatpush1.msra.mxu0 %v688
  %754 = vmatprep.subr.mxu0 %v691
  %755 = vmatpush1.msra.mxu0 %v690
  %756 = vmatprep.subr.mxu0 %v693
  %757 = vmatpush1.msra.mxu0 %v692
  %758 = vmatprep.subr.mxu0 %v695
  %759 = vmatpush1.msra.mxu0 %v694
  %760 = vmatprep.subr.mxu0 %v697
  %761 = vmatpush1.msra.mxu0 %v696
  %762 = vmatprep.subr.mxu0 %v699
  %763 = vmatpush1.msra.mxu0 %v698
  %764 = vmatprep.subr.mxu0 %v701
  %765 = vmatpush1.msra.mxu0 %v700
  %766 = vmatprep.subr.mxu0 %v703
  %767 = vmatpush1.msra.mxu0 %v702
  %768 = vmatprep.subr.mxu0 %v705
  %769 = vmatpush1.msra.mxu0 %v704
  %770 = vmatprep.subr.mxu0 %v707
  %771 = vmatpush1.msra.mxu0 %v706
  %772 = vmatprep.subr.mxu0 %v709
  %773 = vmatpush1.msra.mxu0 %v708
  %774 = vmatprep.subr.mxu0 %v711
  %775 = vmatpush1.msra.mxu0 %v710
  %776 = vmatprep.subr.mxu0 %v713
  %777 = vmatpush1.msra.mxu0 %v712
  %778 = vmatprep.subr.mxu0 %v715
  %779 = vmatpush1.msra.mxu0 %v714
  %780 = vmatprep.subr.mxu0 %v717
  %781 = vmatpush1.msra.mxu0 %v716
  %782 = vmatprep.subr.mxu0 %v719
  %783 = vmatpush1.msra.mxu0 %v718
  %784 = vmatprep.subr.mxu0 %v721
  %785 = vmatpush1.msra.mxu0 %v720
  %786 = vmatprep.subr.mxu0 %v723
  %787 = vmatpush1.msra.mxu0 %v722
  %788 = vmatprep.subr.mxu0 %v725
  %789 = vmatpush1.msra.mxu0 %v724
  %790 = vmatprep.subr.mxu0 %v727
  %791 = vmatpush1.msra.mxu0 %v726
  %792 = vmatprep.subr.mxu0 %v729
  %793 = vmatpush1.msra.mxu0 %v728
  %794 = vmatprep.subr.mxu0 %v731
  %795 = vmatpush1.msra.mxu0 %v730
  %796 = vmatprep.subr.mxu0 %v733
  %797 = vmatpush1.msra.mxu0 %v732
  %798 = vmatprep.subr.mxu0 %v735
  %799 = vmatpush1.msra.mxu0 %v734
  %800 = vmatprep.subr.mxu0 %v737
  %801 = vmatpush1.msra.mxu0 %v736
  %802 = vmatprep.subr.mxu0 %v739
  %803 = vmatpush1.msra.mxu0 %v738
  %804 = vmatprep.subr.mxu0 %v741
  %805 = vmatpush1.msra.mxu0 %v740
  %806 = vmatprep.mubr.f32.mxu0 %v677
  %807 = vmatmul.mubr.f32.gmra.mrb[0].mxu0 %v676
  %v808 = vpop.f32.mrb[0].mxu0
  %v809 = vadd.f32 0.0, %v808
  %v810 = vpop.f32.mrb[0].mxu0
  %v811 = vadd.f32 0.0, %v810
  %812 = vdwg.mxu0
  %v813 = vmul.f32 %v809, 0.001953125
  %v814 = vmul.f32 %v811, 0.001953125
  %v815 = vlaneseq
  %v816 = vshrl.u32 %v815, 7
  %v817 = vsub.s32 0, %v816
  %v818 = vrot.slane %v813, %v817
  %v819 = vlaneseq
  %v820 = vshrl.u32 %v819, 7
  %v821 = vsub.s32 0, %v820
  %v822 = vrot.slane %v814, %v821
  %v823 = vsub.f32 %v475, %v818
  %v824 = vsub.f32 %v476, %v822
  %v825 = vsub.f32 %v477, %v818
  %v826 = vsub.f32 %v478, %v822
  %v827 = vmul.f32 %v823, %v823
  %v828 = vmul.f32 %v824, %v824
  %v829 = vmul.f32 %v825, %v825
  %v830 = vmul.f32 %v826, %v826
  %v831 = vadd.f32 %v827, %v829
  %v832 = vrot.slane %v831, 4
  %v833 = vadd.f32 %v831, %v832
  %v834 = vrot.slane %v833, 2
  %v835 = vadd.f32 %v833, %v834
  %v836 = vrot.slane %v835, 1
  %v837 = vadd.f32 %v835, %v836
  %v838 = vadd.f32 %v828, %v830
  %v839 = vrot.slane %v838, 4
  %v840 = vadd.f32 %v838, %v839
  %v841 = vrot.slane %v840, 2
  %v842 = vadd.f32 %v840, %v841
  %v843 = vrot.slane %v842, 1
  %v844 = vadd.f32 %v842, %v843
  %v845 = vadd.f32 %v837, 0.0
  %v846 = vadd.f32 %v844, 0.0
  %v847 = vsub.f32 %v658, %v818
  %v848 = vsub.f32 %v659, %v822
  %v849 = vsub.f32 %v660, %v818
  %v850 = vsub.f32 %v661, %v822
  %v851 = vmul.f32 %v847, %v847
  %v852 = vmul.f32 %v848, %v848
  %v853 = vmul.f32 %v849, %v849
  %v854 = vmul.f32 %v850, %v850
  %v855 = vadd.f32 %v851, %v853
  %v856 = vrot.slane %v855, 4
  %v857 = vadd.f32 %v855, %v856
  %v858 = vrot.slane %v857, 2
  %v859 = vadd.f32 %v857, %v858
  %v860 = vrot.slane %v859, 1
  %v861 = vadd.f32 %v859, %v860
  %v862 = vadd.f32 %v852, %v854
  %v863 = vrot.slane %v862, 4
  %v864 = vadd.f32 %v862, %v863
  %v865 = vrot.slane %v864, 2
  %v866 = vadd.f32 %v864, %v865
  %v867 = vrot.slane %v866, 1
  %v868 = vadd.f32 %v866, %v867
  %v869 = vadd.f32 %v845, %v861
  %v870 = vadd.f32 %v846, %v868
  %871 = vmatprep.subr.mxu0 %v679
  %872 = vmatpush1.msra.mxu0 %v678
  %873 = vmatprep.subr.mxu0 %v681
  %874 = vmatpush1.msra.mxu0 %v680
  %875 = vmatprep.subr.mxu0 %v683
  %876 = vmatpush1.msra.mxu0 %v682
  %877 = vmatprep.subr.mxu0 %v685
  %878 = vmatpush1.msra.mxu0 %v684
  %879 = vmatprep.subr.mxu0 %v687
  %880 = vmatpush1.msra.mxu0 %v686
  %881 = vmatprep.subr.mxu0 %v689
  %882 = vmatpush1.msra.mxu0 %v688
  %883 = vmatprep.subr.mxu0 %v691
  %884 = vmatpush1.msra.mxu0 %v690
  %885 = vmatprep.subr.mxu0 %v693
  %886 = vmatpush1.msra.mxu0 %v692
  %887 = vmatprep.subr.mxu0 %v695
  %888 = vmatpush1.msra.mxu0 %v694
  %889 = vmatprep.subr.mxu0 %v697
  %890 = vmatpush1.msra.mxu0 %v696
  %891 = vmatprep.subr.mxu0 %v699
  %892 = vmatpush1.msra.mxu0 %v698
  %893 = vmatprep.subr.mxu0 %v701
  %894 = vmatpush1.msra.mxu0 %v700
  %895 = vmatprep.subr.mxu0 %v703
  %896 = vmatpush1.msra.mxu0 %v702
  %897 = vmatprep.subr.mxu0 %v705
  %898 = vmatpush1.msra.mxu0 %v704
  %899 = vmatprep.subr.mxu0 %v707
  %900 = vmatpush1.msra.mxu0 %v706
  %901 = vmatprep.subr.mxu0 %v709
  %902 = vmatpush1.msra.mxu0 %v708
  %903 = vmatprep.subr.mxu0 %v711
  %904 = vmatpush1.msra.mxu0 %v710
  %905 = vmatprep.subr.mxu0 %v713
  %906 = vmatpush1.msra.mxu0 %v712
  %907 = vmatprep.subr.mxu0 %v715
  %908 = vmatpush1.msra.mxu0 %v714
  %909 = vmatprep.subr.mxu0 %v717
  %910 = vmatpush1.msra.mxu0 %v716
  %911 = vmatprep.subr.mxu0 %v719
  %912 = vmatpush1.msra.mxu0 %v718
  %913 = vmatprep.subr.mxu0 %v721
  %914 = vmatpush1.msra.mxu0 %v720
  %915 = vmatprep.subr.mxu0 %v723
  %916 = vmatpush1.msra.mxu0 %v722
  %917 = vmatprep.subr.mxu0 %v725
  %918 = vmatpush1.msra.mxu0 %v724
  %919 = vmatprep.subr.mxu0 %v727
  %920 = vmatpush1.msra.mxu0 %v726
  %921 = vmatprep.subr.mxu0 %v729
  %922 = vmatpush1.msra.mxu0 %v728
  %923 = vmatprep.subr.mxu0 %v731
  %924 = vmatpush1.msra.mxu0 %v730
  %925 = vmatprep.subr.mxu0 %v733
  %926 = vmatpush1.msra.mxu0 %v732
  %927 = vmatprep.subr.mxu0 %v735
  %928 = vmatpush1.msra.mxu0 %v734
  %929 = vmatprep.subr.mxu0 %v737
  %930 = vmatpush1.msra.mxu0 %v736
  %931 = vmatprep.subr.mxu0 %v739
  %932 = vmatpush1.msra.mxu0 %v738
  %933 = vmatprep.subr.mxu0 %v741
  %934 = vmatpush1.msra.mxu0 %v740
  %935 = vmatprep.mubr.f32.mxu0 %v870
  %936 = vmatmul.mubr.f32.gmra.mrb[0].mxu0 %v869
  %v937 = vpop.f32.mrb[0].mxu0
  %v938 = vadd.f32 0.0, %v937
  %v939 = vpop.f32.mrb[0].mxu0
  %v940 = vadd.f32 0.0, %v939
  %941 = vdwg.mxu0
  %v942 = vmul.f32 %v938, 0.001953125
  %v943 = vmul.f32 %v940, 0.001953125
  %v944 = vld [vmem:[%s3] sm:$0x3]
  %v945 = vadd.f32 %v942, 1e-05
  %v946 = vadd.f32 %v943, 1e-05
  %v947 = vrsqrt.pop %v945
  %v948 = vrsqrt.pop %v946
  %v951 = vcombine.low %v947, %v948
  %v953 = vunpack.c.l.s4 1966171168
  %v954 = vunpack.c.0.s8 %v953
  %v955 = vlaneseq
  %v956 = vshrl.u32 %v955, 7
  %v957 = vsub.s32 %v954, %v956
  %v958 = vrot.slane %v951, %v957
  %v960 = vunpack.c.l.s4 1966171168
  %v961 = vunpack.c.0.s8 %v960
  %v962 = vlaneseq
  %v963 = vshrl.u32 %v962, 7
  %v964 = vsub.s32 %v961, %v963
  %v965 = vrot.slane %v958, %v964
  %v967 = vmul.f32 %v944, %v965
  %v968 = vld [vmem:[%s4] sm:$0x3]
  %v970 = vlaneseq
  %v971 = vshrl.u32 %v970, 7
  %v972 = vsub.s32 0, %v971
  %v973 = vrot.slane %v967, %v972
  %v974 = vlaneseq
  %v975 = vshrl.u32 %v974, 7
  %v976 = vsub.s32 1, %v975
  %v977 = vrot.slane %v967, %v976
  %v980 = vmul.f32 %v813, %v973
  %v981 = vmul.f32 %v814, %v977
  %v984 = vcombine.low %v980, %v981
  %v986 = vunpack.c.l.s4 1966171168
  %v987 = vunpack.c.0.s8 %v986
  %v988 = vlaneseq
  %v989 = vshrl.u32 %v988, 7
  %v990 = vsub.s32 %v987, %v989
  %v991 = vrot.slane %v984, %v990
  %v993 = vunpack.c.l.s4 1966171168
  %v994 = vunpack.c.0.s8 %v993
  %v995 = vlaneseq
  %v996 = vshrl.u32 %v995, 7
  %v997 = vsub.s32 %v994, %v996
  %v998 = vrot.slane %v991, %v997
  %v1000 = vsub.f32 %v968, %v998
  %v1001 = vmul.f32 %v475, %v973
  %v1002 = vmul.f32 %v476, %v977
  %v1003 = vmul.f32 %v477, %v973
  %v1004 = vmul.f32 %v478, %v977
  %v1006 = vlaneseq
  %v1007 = vshrl.u32 %v1006, 7
  %v1008 = vsub.s32 0, %v1007
  %v1009 = vrot.slane %v1000, %v1008
  %v1010 = vlaneseq
  %v1011 = vshrl.u32 %v1010, 7
  %v1012 = vsub.s32 1, %v1011
  %v1013 = vrot.slane %v1000, %v1012
  %v1016 = vadd.f32 %v1001, %v1009
  %v1017 = vadd.f32 %v1002, %v1013
  %v1018 = vadd.f32 %v1003, %v1009
  %v1019 = vadd.f32 %v1004, %v1013
  %v1020 = vmax.f32 %v1016, 0.0
  %v1021 = vmax.f32 %v1017, 0.0
  %v1022 = vmax.f32 %v1018, 0.0
  %v1023 = vmax.f32 %v1019, 0.0
  %v1024 = vpack.c.bf16 %v1022, %v1020
  %v1025 = vpack.c.bf16 %v1023, %v1021
  %v1028 = vunpack.c.l.b16 %v1024
  %v1029 = vunpack.c.l.b16 %v1025
  %v1030 = vunpack.c.h.b16 %v1024
  %v1031 = vunpack.c.h.b16 %v1025
  %v1032 = vpack.c.b16 %v1029, %v1028
  %v1033 = vpack.c.b16 %v1031, %v1030
  %1036 = vst [vmem:[%s5] sm:$0xff] %v1032
  %1037 = vst [vmem:[%s5 + $0x8] sm:$0xff] %v1033
  %v1038 = vmul.f32 %v658, %v973
  %v1039 = vmul.f32 %v659, %v977
  %v1040 = vmul.f32 %v660, %v973
  %v1041 = vmul.f32 %v661, %v977
  %v1042 = vadd.f32 %v1038, %v1009
  %v1043 = vadd.f32 %v1039, %v1013
  %v1044 = vadd.f32 %v1040, %v1009
  %v1045 = vadd.f32 %v1041, %v1013
  %v1046 = vmax.f32 %v1042, 0.0
  %v1047 = vmax.f32 %v1043, 0.0
  %v1048 = vmax.f32 %v1044, 0.0
  %v1049 = vmax.f32 %v1045, 0.0
  %v1050 = vpack.c.bf16 %v1048, %v1046
  %v1051 = vpack.c.bf16 %v1049, %v1047
  %v1054 = vunpack.c.l.b16 %v1050
  %v1055 = vunpack.c.l.b16 %v1051
  %v1056 = vunpack.c.h.b16 %v1050
  %v1057 = vunpack.c.h.b16 %v1051
  %v1058 = vpack.c.b16 %v1055, %v1054
  %v1059 = vpack.c.b16 %v1057, %v1056
  %s1062 = scalar_lea.vmem %s5, 16
  %1063 = vst [vmem:[%s1062] sm:$0xff] %v1058
  %1064 = vst [vmem:[%s1062 + $0x8] sm:$0xff] %v1059
  // Predicated region
  $region22: #{conv3x3_bn_relu.1} parent=0 // pred_check
    _
  $region23: #{conv3x3_bn_relu.1} parent=0 // pred_check_branch
    %1066 = sbr.rel (0) target = $region25
  $region24: #{conv3x3_bn_relu.1} parent=0 // pred_region
    _
  $region25: #{conv3x3_bn_relu.1} parent=0 // pred_fallthru
    _
  // Predicated region
  $region26: #{conv3x3_bn_relu.1} parent=0 // pred_check
    _
  $region27: #{conv3x3_bn_relu.1} parent=0 // pred_check_branch
    %1068 = sbr.rel (0) target = $region29
  $region28: #{conv3x3_bn_relu.1} parent=0 // pred_region
    _
  $region29: #{conv3x3_bn_relu.1} parent=0 // pred_fallthru
    _

</llo_original>
